<compile_context>
chip_gen: v6e
topology: v6e:2x2x1
jax: 0.10.0
libtpu: 0.0.40
codegen_flags: <defaults>
</compile_context>

<pallas_src>
import functools

import jax
import jax.numpy as jnp
from jax.experimental import pallas as pl
from jax.experimental.pallas import tpu as pltpu


def _round_up(x, m):
    return (x + m - 1) // m * m


def _round_down(x, m):
    return (x // m) * m


@functools.lru_cache(maxsize=1)
def _vmem_capacity_bytes():
    # Per-generation physical VMEM (128 MiB on v5e/v6e, 64 MiB per TC on v7x).
    try:
        return int(pltpu.get_tpu_info().vmem_capacity_bytes)
    except Exception:
        return 64 << 20  # conservative (v7x-sized) fallback


def ssnet_kernel(b_ref, x_ref, w_ref, o_ref):
    # b_ref: SMEM (1, 1) bias scalar
    # x_ref: VMEM (tile_b, D) input rows (streamed)
    # w_ref: VMEM (1, D) weight row (resident across the grid)
    # o_ref: VMEM (1, tile_b) lane-dense output slab
    logits = jax.lax.dot_general(
        w_ref[...], x_ref[...],
        dimension_numbers=(((1,), (1,)), ((), ())),   # (1,D) . (tile_b,D)^T
        preferred_element_type=jnp.float32,
    )                                                 # -> (1, tile_b)
    logits = logits + b_ref[0, 0]
    # Note: (1, tile_b) uses 1 of 8 sublanes for the VPU add / EUP sigmoid;
    # that's fine -- this kernel is HBM-bound, compute has huge slack.
    o_ref[...] = jax.nn.sigmoid(logits).astype(o_ref.dtype)


@functools.partial(jax.jit, static_argnames=("target_tile_bytes",))
def ssnet_forward(x, w, b, *, target_tile_bytes=8 << 20):
    """x: (B, D), w: (1, D) (nn.Linear layout), b: (1, 1) -> (B, 1)."""
    B, D = x.shape
    itemsize = jnp.dtype(x.dtype).itemsize
    row_bytes = D * itemsize

    vmem_cap = _vmem_capacity_bytes()
    x_budget = (vmem_cap * 3) // 8                 # ~24 MiB v7x, ~48 MiB v5e/v6e
    max_tile_bytes = max(x_budget // 2, row_bytes)  # per buffer (double-buffered)

    # Tile the batch by bytes (amortize per-grid-step overhead), capped by the
    # per-generation VMEM budget, 128-aligned so output blocks stay lane-dense.
    tile_b = min(int(target_tile_bytes), max_tile_bytes) // row_bytes
    tile_b = max(128, _round_down(tile_b, 128))
    # TODO(synk): degenerate very-wide-D case (2 * 128 * row_bytes > VMEM) would
    # need a K (feature) grid axis with an f32 accumulator; not needed for
    # sentiment-embedding sized inputs.

    if B <= tile_b:
        if B >= 256:
            # Split into 2 tiles so both TensorCores of a v7x chip get work.
            tile_b = _round_up(pl.cdiv(B, 2), 128)
        else:
            tile_b = B  # single block == full array dims (always legal)
    num_tiles = pl.cdiv(B, tile_b)
    if num_tiles > 2 and num_tiles % 2 == 1:
        # Even-ish tile count for 2-core load balance.
        tile_b = max(128, _round_up(pl.cdiv(B, num_tiles + 1), 128))
        num_tiles = pl.cdiv(B, tile_b)

    tile_bytes = tile_b * row_bytes

    # Extra pipeline depth only when tiles end up small but numerous.
    if tile_bytes < (2 << 20) and num_tiles >= 4:
        x_buffers = 3
        x_spec = pl.BlockSpec((tile_b, D), lambda i: (i, 0),
                              pipeline_mode=pl.Buffered(3))
    else:
        x_buffers = 2
        x_spec = pl.BlockSpec((tile_b, D), lambda i: (i, 0))

    vmem_limit = (x_buffers * tile_bytes        # streamed x tiles
                  + 2 * tile_b * 4              # double-buffered output row
                  + 2 * row_bytes               # resident weight row
                  + (4 << 20))                  # headroom
    vmem_limit = int(min(max(vmem_limit, 16 << 20), vmem_cap))

    cost = pl.CostEstimate(
        flops=2 * B * D,
        transcendentals=B,
        bytes_accessed=(B * D + D) * itemsize + B * 4,
    )

    out = pl.pallas_call(
        ssnet_kernel,
        out_shape=jax.ShapeDtypeStruct((1, B), x.dtype),
        grid=(num_tiles,),
        in_specs=[
            pl.BlockSpec(memory_space=pltpu.MemorySpace.SMEM),   # bias (1,1)
            x_spec,                                              # x tile (streamed)
            pl.BlockSpec((1, D), lambda i: (0, 0)),              # weight row (resident)
        ],
        out_specs=pl.BlockSpec((1, tile_b), lambda i: (0, i)),   # lane-dense slab
        compiler_params=pltpu.CompilerParams(
            dimension_semantics=("parallel",),
            vmem_limit_bytes=vmem_limit,
        ),
        cost_estimate=cost,
    )(b, x, w)

    # (1, B) -> (B, 1); no padded tail to trim (ragged last block is masked on
    # writeback, so only valid lanes ever reach HBM).
    return out.reshape(B, 1)


def ssnet_reference(x, w, b):
    return jax.nn.sigmoid(x @ w.T + b[0, 0])


if __name__ == "__main__":
    key = jax.random.PRNGKey(0)
    kx, kw, kb, kx2 = jax.random.split(key, 4)

    batch, input_size = 8, 32

    # Deterministic parameter init (mimics nn.Linear's uniform(-1/sqrt(D), 1/sqrt(D)))
    bound = 1.0 / jnp.sqrt(jnp.float32(input_size))
    w = jax.random.uniform(kw, (1, input_size), jnp.float32, -bound, bound)  # (out=1, in=D)
    b = jax.random.uniform(kb, (1, 1), jnp.float32, -bound, bound)

    # Example sentiment embedding input
    x = jax.random.normal(kx, (batch, input_size), jnp.float32)

    out = ssnet_forward(x, w, b)
    out = jax.block_until_ready(out)
    ref = ssnet_reference(x, w, b)
    assert out.shape == (batch, 1)
    assert jnp.allclose(out, ref, atol=1e-5, rtol=1e-5)

    # Second check: batch that is not a tile multiple exercises the no-pad
    # ragged-last-block path and the 2-tile (dual-TensorCore) split.
    batch2 = 300
    x2 = jax.random.normal(kx2, (batch2, input_size), jnp.float32)
    out2 = jax.block_until_ready(ssnet_forward(x2, w, b))
    ref2 = ssnet_reference(x2, w, b)
    assert out2.shape == (batch2, 1)
    assert jnp.allclose(out2, ref2, atol=1e-5, rtol=1e-5)

    print("KERNEL_OK")
</pallas_src>

<mosaic_0001>
module attributes {stable_mosaic.version = 11 : i64} {
  func.func @ssnet_kernel(%arg0: i32, %arg1: memref<1x1xf32, #tpu.memory_space<smem>>, %arg2: memref<8x32xf32, #tpu.memory_space<vmem>>, %arg3: memref<1x32xf32, #tpu.memory_space<vmem>>, %arg4: memref<1x8xf32, #tpu.memory_space<vmem>>) attributes {dimension_semantics = [#tpu.dimension_semantics<parallel>], iteration_bounds = array<i64: 1>, scalar_prefetch = 0 : i64, scratch_operands = 0 : i64, tpu.core_type = #tpu.core_type<tc>, window_params = [{transform_indices = @transform_0, window_bounds = array<i64: 1, 1>}, {transform_indices = @transform_1, window_bounds = array<i64: 8, 32>}, {pipeline_mode = #tpu.pipeline_mode<synchronous>, transform_indices = @transform_2, window_bounds = array<i64: 1, 32>}, {transform_indices = @transform_3, window_bounds = array<i64: 1, 8>}]} {
    %c0 = arith.constant 0 : index
    %c0_0 = arith.constant 0 : index
    %0 = vector.load %arg3[%c0, %c0_0] : memref<1x32xf32, #tpu.memory_space<vmem>>, vector<1x32xf32>
    %c0_1 = arith.constant 0 : index
    %c0_2 = arith.constant 0 : index
    %1 = vector.load %arg2[%c0_1, %c0_2] : memref<8x32xf32, #tpu.memory_space<vmem>>, vector<8x32xf32>
    %cst = arith.constant dense<0.000000e+00> : vector<1x8xf32>
    %2 = tpu.matmul %0, %1, %cst {dimension_numbers = #tpu.dot_dimension_numbers<[1], [1], [0], [0], [0, 0, 1, 0], [], []>} : vector<1x32xf32>, vector<8x32xf32>, vector<1x8xf32> -> vector<1x8xf32>
    %c0_3 = arith.constant 0 : index
    %c0_4 = arith.constant 0 : index
    %3 = memref.load %arg1[%c0_3, %c0_4] : memref<1x1xf32, #tpu.memory_space<smem>>
    %4 = vector.broadcast %3 : f32 to vector<1x8xf32>
    %5 = arith.addf %2, %4 : vector<1x8xf32>
    %6 = arith.negf %5 : vector<1x8xf32>
    %7 = math.exp %6 : vector<1x8xf32>
    %cst_5 = arith.constant 1.000000e+00 : f32
    %8 = vector.broadcast %cst_5 : f32 to vector<1x8xf32>
    %9 = arith.addf %8, %7 : vector<1x8xf32>
    %10 = arith.divf %8, %9 : vector<1x8xf32>
    %c0_6 = arith.constant 0 : index
    %c0_7 = arith.constant 0 : index
    %11 = vector.load %arg4[%c0_6, %c0_7] : memref<1x8xf32, #tpu.memory_space<vmem>>, vector<1x8xf32>
    tpu.vector_store %arg4[%c0_6, %c0_7], %10 {strides = array<i32>} : memref<1x8xf32, #tpu.memory_space<vmem>>, vector<1x8xf32>,
    return
  }
  func.func @transform_0(%arg0: i32) -> (i32, i32) {
    %c0_i32 = arith.constant 0 : i32
    %c0_i32_0 = arith.constant 0 : i32
    %c0_i32_1 = arith.constant 0 : i32
    return %c0_i32, %c0_i32_0 : i32, i32
  }
  func.func @transform_1(%arg0: i32) -> (i32, i32) {
    %c0_i32 = arith.constant 0 : i32
    %c0_i32_0 = arith.constant 0 : i32
    return %arg0, %c0_i32 : i32, i32
  }
  func.func @transform_2(%arg0: i32) -> (i32, i32) {
    %c0_i32 = arith.constant 0 : i32
    %c0_i32_0 = arith.constant 0 : i32
    %c0_i32_1 = arith.constant 0 : i32
    return %c0_i32, %c0_i32_0 : i32, i32
  }
  func.func @transform_3(%arg0: i32) -> (i32, i32) {
    %c0_i32 = arith.constant 0 : i32
    %c0_i32_0 = arith.constant 0 : i32
    return %c0_i32, %arg0 : i32, i32
  }
}

</mosaic_0001>

<llo_original>
// kernel: ssnet_forward.1
$region0: #{ssnet_forward.1}
  #allocation0 [shape = 'u32[]', space=smem, size = 0x4, offset = 0x4, fixed_abs, tag = 'smem constant byte address 0x4 - core index']
  #allocation1 [shape = 'u32[144,128]{1,0:T(1,128)}', space=vmem, size = 0x12000, scoped, tag = 'internal scratch']
  #allocation2 [shape = 'f32[1,1]{1,0:T(1,128)S(6)}', space=smem, size = 0x200, scoped, tag = 'scoped memory for ssnet_forward.1']
  %s0 = inlined_call_operand.<no memory space> [shape: f32[1,1], index: 0, kind: input, shape index: {}]
  %s1 = inlined_call_operand.hbm [shape: f32[8,32], index: 1, kind: input, shape index: {}]
  %s2 = inlined_call_operand.vmem [shape: f32[1,32], index: 2, kind: input, shape index: {}]
  %s3 = inlined_call_operand.hbm [shape: f32[1,8], index: 3, kind: output, shape index: {}]
  %s4 = sld [smem:[#allocation0]]
  $region26: #{ssnet_forward.1} parent=0
    _
  %s6 = ssub.s32 1, %s4
  %s7 = scalar_select 0, %s6, %s4
  %8 = sst [smem:[#allocation2]] %s0
  $region1: #{ssnet_forward.1} parent=0
    #allocation3 [shape = 'u8[4096]{0}', space=vmem, size = 0x1000, scoped, tag = 'input window, operand 1, single buffered']
    #allocation4 [shape = 's32[1]{0}', space=sflag, size = 0x4, scoped, tag = 'scoped memory for ssnet_forward.1']
    #allocation5 [shape = 's32[1]{0}', space=sflag, size = 0x4, scoped, tag = 'scoped memory for ssnet_forward.1']
    #allocation6 [shape = 'u8[512]{0}', space=vmem, size = 0x400, scoped, tag = 'output window, operand 0, single buffered']
    %9 = vsyncpa [#allocation4], 0
    %10 = vsyncpa [#allocation5], 0
    // Predicated region
    $region2: #{ssnet_forward.1} parent=1 // pred_check
      _
    $region3: #{ssnet_forward.1} parent=1 // pred_check_branch
      %12 = sbr.rel (0) target = $region5
    $region4: #{ssnet_forward.1} parent=1 // pred_region
      _
    $region5: #{ssnet_forward.1} parent=1 // pred_fallthru
      _
    // Predicated region
    $region6: #{ssnet_forward.1} parent=1 // pred_check
      _
    $region7: #{ssnet_forward.1} parent=1 // pred_check_branch
      %14 = sbr.rel (0) target = $region9
    $region8: #{ssnet_forward.1} parent=1 // pred_region
      %s16 = ssub.s32 128, 128
      %17 = vsyncadd [#allocation4], %s16
      %s19 = sshll.u32 [#allocation3], 4
      %s20 = int_to_ptr.vmem [resolvable:$true] %s19
      %22 = dma.hbm_to_vmem [thread:$0]  %s1, 128, %s20, [#allocation4]
    $region9: #{ssnet_forward.1} parent=1 // pred_fallthru
      _
    // Predicated region
    $region10: #{ssnet_forward.1} parent=1 // pred_check
      _
    $region11: #{ssnet_forward.1} parent=1 // pred_check_branch
      %24 = sbr.rel (0) target = $region13
    $region12: #{ssnet_forward.1} parent=1 // pred_region
      _
    $region13: #{ssnet_forward.1} parent=1 // pred_fallthru
      _
    // Predicated region
    $region14: #{ssnet_forward.1} parent=1 // pred_check
      _
    $region15: #{ssnet_forward.1} parent=1 // pred_check_branch
      %26 = sbr.rel (0) target = $region17
    $region16: #{ssnet_forward.1} parent=1 // pred_region
      %27 = dma.done [#allocation4], 128
    $region17: #{ssnet_forward.1} parent=1 // pred_fallthru
      _
    %v28 = vld [vmem:[%s2] sm:$0x1]
    %v29 = vld [vmem:[#allocation3] sm:$0xff]
    %s30 = sld [smem:[#allocation2]]
    %v31 = vstv %s30
    %vm32 = vcmask 261120
    %v34 = vsel %vm32, %v28, 0
    %v37 = vsel %vm32, %v29, 0
    %39 = vmatprep.subr.mxu0 0.0
    %40 = vmatpush1.xpose.msra.mxu0 0.0
    %41 = vmatprep.subr.mxu0 0.0
    %42 = vmatpush1.xpose.msra.mxu0 0.0
    %43 = vmatprep.subr.mxu0 0.0
    %44 = vmatpush1.xpose.msra.mxu0 0.0
    %45 = vmatprep.subr.mxu0 0.0
    %46 = vmatpush1.xpose.msra.mxu0 0.0
    %47 = vmatprep.subr.mxu0 0.0
    %48 = vmatpush1.xpose.msra.mxu0 0.0
    %49 = vmatprep.subr.mxu0 0.0
    %50 = vmatpush1.xpose.msra.mxu0 0.0
    %51 = vmatprep.subr.mxu0 0.0
    %52 = vmatpush1.xpose.msra.mxu0 0.0
    %53 = vmatprep.subr.mxu0 0.0
    %54 = vmatpush1.xpose.msra.mxu0 0.0
    %55 = vmatprep.subr.mxu0 0.0
    %56 = vmatpush1.xpose.msra.mxu0 0.0
    %57 = vmatprep.subr.mxu0 0.0
    %58 = vmatpush1.xpose.msra.mxu0 0.0
    %59 = vmatprep.subr.mxu0 0.0
    %60 = vmatpush1.xpose.msra.mxu0 0.0
    %61 = vmatprep.subr.mxu0 0.0
    %62 = vmatpush1.xpose.msra.mxu0 0.0
    %63 = vmatprep.subr.mxu0 0.0
    %64 = vmatpush1.xpose.msra.mxu0 0.0
    %65 = vmatprep.subr.mxu0 0.0
    %66 = vmatpush1.xpose.msra.mxu0 0.0
    %67 = vmatprep.subr.mxu0 0.0
    %68 = vmatpush1.xpose.msra.mxu0 0.0
    %69 = vmatprep.subr.mxu0 0.0
    %70 = vmatpush1.xpose.msra.mxu0 %v37
    %71 = vmatprep.subr.mxu0 0.0
    %72 = vmatpush2.xpose.msra.mxu0 0.0
    %73 = vmatprep.subr.mxu0 0.0
    %74 = vmatpush2.xpose.msra.mxu0 0.0
    %75 = vmatprep.subr.mxu0 0.0
    %76 = vmatpush2.xpose.msra.mxu0 0.0
    %77 = vmatprep.subr.mxu0 0.0
    %78 = vmatpush2.xpose.msra.mxu0 0.0
    %79 = vmatprep.subr.mxu0 0.0
    %80 = vmatpush2.xpose.msra.mxu0 0.0
    %81 = vmatprep.subr.mxu0 0.0
    %82 = vmatpush2.xpose.msra.mxu0 0.0
    %83 = vmatprep.subr.mxu0 0.0
    %84 = vmatpush2.xpose.msra.mxu0 0.0
    %85 = vmatprep.subr.mxu0 0.0
    %86 = vmatpush2.xpose.msra.mxu0 0.0
    %87 = vmatprep.subr.mxu0 0.0
    %88 = vmatpush2.xpose.msra.mxu0 0.0
    %89 = vmatprep.subr.mxu0 0.0
    %90 = vmatpush2.xpose.msra.mxu0 0.0
    %91 = vmatprep.subr.mxu0 0.0
    %92 = vmatpush2.xpose.msra.mxu0 0.0
    %93 = vmatprep.subr.mxu0 0.0
    %94 = vmatpush2.xpose.msra.mxu0 0.0
    %95 = vmatprep.subr.mxu0 0.0
    %96 = vmatpush2.xpose.msra.mxu0 0.0
    %97 = vmatprep.subr.mxu0 0.0
    %98 = vmatpush2.xpose.msra.mxu0 0.0
    %99 = vmatprep.subr.mxu0 0.0
    %100 = vmatpush2.xpose.msra.mxu0 0.0
    %101 = vmatprep.subr.mxu0 0.0
    %102 = vmatpush2.xpose.msra.mxu0 0.0
    %103 = vmatprep.mubr.f32.mxu0 0.0
    %104 = vmatmul.mubr.f32.gmra.mxu0 %v34
    %v105 = vpop.f32.mrf.mxu0
    %v106 = vadd.f32 %v31, %v105
    %v107 = vpop.f32.mrf.mxu0
    %108 = vdwg.mxu0
    %v109 = vxor.u32 %v106, 2147483648
    %v110 = vmul.f32 %v109, 1.442695
    %v111 = vpow.pop %v110
    %v112 = vadd.f32 %v111, 1.0
    %v113 = vrcp.pop %v112
    %v114 = vmul.f32 1.0, %v113
    %vm115 = vcmask 57344
    %116 = vst.msk [vmem:[#allocation6] sm:$0x1] %vm115, %v114
    // Predicated region
    $region18: #{ssnet_forward.1} parent=1 // pred_check
      _
    $region19: #{ssnet_forward.1} parent=1 // pred_check_branch
      %118 = sbr.rel (0) target = $region21
    $region20: #{ssnet_forward.1} parent=1 // pred_region
      %s120 = ssub.s32 16, 16
      %121 = vsyncadd [#allocation5], %s120
      %s123 = sshll.u32 [#allocation6], 4
      %s124 = int_to_ptr.vmem [resolvable:$true] %s123
      %126 = dma.vmem_to_hbm [thread:$0]  %s124, 16, %s3, [#allocation5]
    $region21: #{ssnet_forward.1} parent=1 // pred_fallthru
      _
    // Predicated region
    $region22: #{ssnet_forward.1} parent=1 // pred_check
      _
    $region23: #{ssnet_forward.1} parent=1 // pred_check_branch
      %128 = sbr.rel (0) target = $region25
    $region24: #{ssnet_forward.1} parent=1 // pred_region
      %129 = dma.done [#allocation5], 16
    $region25: #{ssnet_forward.1} parent=1 // pred_fallthru
      _
    %130 = vsyncpa [#allocation4], 1
    %131 = vsyncpa [#allocation5], 1

</llo_original>
